<compile_context>
chip_gen: v7x
topology: tpu7x:2x2x1
jax: 0.10.0
libtpu: 0.0.40
codegen_flags: <defaults>
</compile_context>

<pallas_src>
import functools
import math

import jax
import jax.numpy as jnp
from jax.experimental import pallas as pl
from jax.experimental.pallas import tpu as pltpu

TAU = 1.0                 # F.gumbel_softmax default temperature
INV_TAU = 1.0 / TAU
LANE = 128


def _gumbel_speaker_kernel(out_dim, obs_ref, g_ref,
                           w1_ref, b1_ref, w2_ref, b2_ref, w3_ref, b3_ref,
                           msg_ref):
    # MLP: Linear -> ReLU -> Linear -> ReLU -> Linear.
    # bf16 MXU operands, f32 accumulation; all elementwise math in f32.
    x = obs_ref[...].astype(jnp.bfloat16)
    h1 = jnp.dot(x, w1_ref[...], preferred_element_type=jnp.float32) + b1_ref[...]
    h1 = jnp.maximum(h1, 0.0)
    h2 = jnp.dot(h1.astype(jnp.bfloat16), w2_ref[...],
                 preferred_element_type=jnp.float32) + b2_ref[...]
    h2 = jnp.maximum(h2, 0.0)
    logits = jnp.dot(h2.astype(jnp.bfloat16), w3_ref[...],
                     preferred_element_type=jnp.float32) + b3_ref[...]

    # gumbel_softmax(hard=True) forward value == one-hot(argmax((logits + g) / tau)).
    y = logits + g_ref[...]
    if INV_TAU != 1.0:            # constant multiply instead of divide; skipped at tau=1
        y = y * INV_TAU

    col = jax.lax.broadcasted_iota(jnp.int32, y.shape, 1)
    y = jnp.where(col < out_dim, y, -jnp.inf)      # mask lane-padding columns

    m = jnp.max(y, axis=-1, keepdims=True)
    cand = jnp.where(y == m, col, y.shape[-1])     # first index achieving the max
    idx = jnp.min(cand, axis=-1, keepdims=True)    # (matches torch.argmax tie-break)

    msg_ref[...] = (col == idx).astype(jnp.float32)


def _pick_batch_tile(B):
    for tb in (512, 256, 128, 64, 32, 16, 8):
        if B % tb == 0:
            return tb
    return B   # odd / tiny batches: single whole-batch block


@jax.jit
def _forward_impl(obs, g, params):
    w1, b1, w2, b2, w3, b3 = params
    B, in_dim = obs.shape
    hidden = w1.shape[1]
    out_dim = w3.shape[1]
    out_pad = ((out_dim + LANE - 1) // LANE) * LANE

    # Lane-pad the final layer / noise so the kernel's msg output is lane-dense.
    w3p = jnp.pad(w3, ((0, 0), (0, out_pad - out_dim)))
    b3p = jnp.pad(b3, ((0, 0), (0, out_pad - out_dim)))
    gp = jnp.pad(g, ((0, 0), (0, out_pad - out_dim)))

    # bf16 matmul operands (halves weight DMA + doubles MXU rate); biases stay f32.
    w1b = w1.astype(jnp.bfloat16)
    w2b = w2.astype(jnp.bfloat16)
    w3b = w3p.astype(jnp.bfloat16)

    tb = _pick_batch_tile(B)
    grid = (B // tb,)

    flops = 2 * B * (in_dim * hidden + hidden * hidden + hidden * out_pad)
    bytes_accessed = (obs.nbytes + gp.nbytes
                      + w1b.nbytes + w2b.nbytes + w3b.nbytes
                      + b1.nbytes + b2.nbytes + b3p.nbytes
                      + B * out_pad * 4)

    row = lambda i: (i, 0)     # batch-streamed operands
    const = lambda i: (0, 0)   # VMEM-resident weights/biases

    msg_full = pl.pallas_call(
        functools.partial(_gumbel_speaker_kernel, out_dim),
        out_shape=jax.ShapeDtypeStruct((B, out_pad), jnp.float32),
        grid=grid,
        in_specs=[
            pl.BlockSpec((tb, in_dim), row),        # obs
            pl.BlockSpec((tb, out_pad), row),       # gumbel noise
            pl.BlockSpec((in_dim, hidden), const),  # w1
            pl.BlockSpec((1, hidden), const),       # b1
            pl.BlockSpec((hidden, hidden), const),  # w2
            pl.BlockSpec((1, hidden), const),       # b2
            pl.BlockSpec((hidden, out_pad), const),  # w3 (lane-padded)
            pl.BlockSpec((1, out_pad), const),       # b3 (lane-padded)
        ],
        out_specs=pl.BlockSpec((tb, out_pad), row),
        compiler_params=pltpu.CompilerParams(
            dimension_semantics=("parallel",)),
        cost_estimate=pl.CostEstimate(flops=flops, transcendentals=0,
                                      bytes_accessed=bytes_accessed),
    )(obs, gp, w1b, b1, w2b, b2, w3b, b3p)

    msg = msg_full[:, :out_dim]
    idx = jnp.argmax(msg, axis=1).astype(jnp.int32)
    return msg, idx


def gumbel_speaker_forward(obs, g, params):
    """Returns (msg, msg.argmax(1), 0), matching GumbelSpeaker.forward."""
    # TODO(synk): straight-through gradient of gumbel_softmax(hard=True) is not
    # represented (forward-only); training parity would need a custom_vjp.
    msg, idx = _forward_impl(obs, g, params)
    return msg, idx, 0


def init_mlp_params(key, in_dim, out_dim, hidden_dim=64):
    """Xavier-uniform(gain=sqrt(2)) weights, biases filled with 0.01 (MLPNetwork.init)."""
    gain = math.sqrt(2.0)  # nn.init.calculate_gain('relu')

    def xavier(k, fan_in, fan_out):
        bound = gain * math.sqrt(6.0 / (fan_in + fan_out))
        return jax.random.uniform(k, (fan_in, fan_out), jnp.float32, -bound, bound)

    k1, k2, k3 = jax.random.split(key, 3)
    w1 = xavier(k1, in_dim, hidden_dim)
    b1 = jnp.full((1, hidden_dim), 0.01, jnp.float32)
    w2 = xavier(k2, hidden_dim, hidden_dim)
    b2 = jnp.full((1, hidden_dim), 0.01, jnp.float32)
    w3 = xavier(k3, hidden_dim, out_dim)
    b3 = jnp.full((1, out_dim), 0.01, jnp.float32)
    return (w1, b1, w2, b2, w3, b3)


if __name__ == "__main__":
    B, IN_DIM, OUT_DIM = 8, 16, 8

    root = jax.random.PRNGKey(0)
    k_params, k_obs, k_gumbel = jax.random.split(root, 3)

    params = init_mlp_params(k_params, IN_DIM, OUT_DIM)
    obs = jax.random.normal(k_obs, (B, IN_DIM), jnp.float32)

    # Gumbel(0,1) noise: -log(Exponential(1))  (same as PyTorch's sampling path)
    g = -jnp.log(jax.random.exponential(k_gumbel, (B, OUT_DIM), jnp.float32))

    msg, idx, zero = gumbel_speaker_forward(obs, g, params)
    jax.block_until_ready((msg, idx))

    # sanity checks: msg is one-hot over dim 1, idx matches msg.argmax(1)
    assert msg.shape == (B, OUT_DIM) and idx.shape == (B,)
    assert bool(jnp.all(jnp.sum(msg, axis=1) == 1.0))
    assert bool(jnp.all(jnp.argmax(msg, axis=1) == idx))
    assert zero == 0

    print("KERNEL_OK")
</pallas_src>

<mosaic_0001>
module attributes {stable_mosaic.version = 11 : i64} {
  func.func @_gumbel_speaker_kernel(%arg0: i32, %arg1: memref<8x16xf32, #tpu.memory_space<vmem>>, %arg2: memref<8x128xf32, #tpu.memory_space<vmem>>, %arg3: memref<16x64xbf16, #tpu.memory_space<vmem>>, %arg4: memref<1x64xf32, #tpu.memory_space<vmem>>, %arg5: memref<64x64xbf16, #tpu.memory_space<vmem>>, %arg6: memref<1x64xf32, #tpu.memory_space<vmem>>, %arg7: memref<64x128xbf16, #tpu.memory_space<vmem>>, %arg8: memref<1x128xf32, #tpu.memory_space<vmem>>, %arg9: memref<8x128xf32, #tpu.memory_space<vmem>>) attributes {dimension_semantics = [#tpu.dimension_semantics<parallel>], iteration_bounds = array<i64: 1>, scalar_prefetch = 0 : i64, scratch_operands = 0 : i64, tpu.core_type = #tpu.core_type<tc>, window_params = [{transform_indices = @transform_0, window_bounds = array<i64: 8, 16>}, {transform_indices = @transform_1, window_bounds = array<i64: 8, 128>}, {pipeline_mode = #tpu.pipeline_mode<synchronous>, transform_indices = @transform_2, window_bounds = array<i64: 16, 64>}, {pipeline_mode = #tpu.pipeline_mode<synchronous>, transform_indices = @transform_3, window_bounds = array<i64: 1, 64>}, {pipeline_mode = #tpu.pipeline_mode<synchronous>, transform_indices = @transform_4, window_bounds = array<i64: 64, 64>}, {pipeline_mode = #tpu.pipeline_mode<synchronous>, transform_indices = @transform_5, window_bounds = array<i64: 1, 64>}, {pipeline_mode = #tpu.pipeline_mode<synchronous>, transform_indices = @transform_6, window_bounds = array<i64: 64, 128>}, {pipeline_mode = #tpu.pipeline_mode<synchronous>, transform_indices = @transform_7, window_bounds = array<i64: 1, 128>}, {transform_indices = @transform_8, window_bounds = array<i64: 8, 128>}]} {
    %c0 = arith.constant 0 : index
    %c0_0 = arith.constant 0 : index
    %0 = vector.load %arg1[%c0, %c0_0] : memref<8x16xf32, #tpu.memory_space<vmem>>, vector<8x16xf32>
    %1 = arith.truncf %0 : vector<8x16xf32> to vector<8x16xbf16>
    %c0_1 = arith.constant 0 : index
    %c0_2 = arith.constant 0 : index
    %2 = vector.load %arg3[%c0_1, %c0_2] : memref<16x64xbf16, #tpu.memory_space<vmem>>, vector<16x64xbf16>
    %cst = arith.constant dense<0.000000e+00> : vector<8x64xf32>
    %3 = tpu.matmul %1, %2, %cst {dimension_numbers = #tpu.dot_dimension_numbers<[1], [0], [0], [1], [0, 0, 1, 1], [], []>} : vector<8x16xbf16>, vector<16x64xbf16>, vector<8x64xf32> -> vector<8x64xf32>
    %c0_3 = arith.constant 0 : index
    %c0_4 = arith.constant 0 : index
    %4 = vector.load %arg4[%c0_3, %c0_4] : memref<1x64xf32, #tpu.memory_space<vmem>>, vector<1x64xf32>
    %5 = vector.broadcast %4 : vector<1x64xf32> to vector<8x64xf32>
    %6 = arith.addf %3, %5 : vector<8x64xf32>
    %cst_5 = arith.constant 0.000000e+00 : f32
    %7 = vector.broadcast %cst_5 : f32 to vector<8x64xf32>
    %8 = arith.maximumf %6, %7 : vector<8x64xf32>
    %9 = arith.truncf %8 : vector<8x64xf32> to vector<8x64xbf16>
    %c0_6 = arith.constant 0 : index
    %c0_7 = arith.constant 0 : index
    %10 = vector.load %arg5[%c0_6, %c0_7] : memref<64x64xbf16, #tpu.memory_space<vmem>>, vector<64x64xbf16>
    %cst_8 = arith.constant dense<0.000000e+00> : vector<8x64xf32>
    %11 = tpu.matmul %9, %10, %cst_8 {dimension_numbers = #tpu.dot_dimension_numbers<[1], [0], [0], [1], [0, 0, 1, 1], [], []>} : vector<8x64xbf16>, vector<64x64xbf16>, vector<8x64xf32> -> vector<8x64xf32>
    %c0_9 = arith.constant 0 : index
    %c0_10 = arith.constant 0 : index
    %12 = vector.load %arg6[%c0_9, %c0_10] : memref<1x64xf32, #tpu.memory_space<vmem>>, vector<1x64xf32>
    %13 = vector.broadcast %12 : vector<1x64xf32> to vector<8x64xf32>
    %14 = arith.addf %11, %13 : vector<8x64xf32>
    %cst_11 = arith.constant 0.000000e+00 : f32
    %15 = vector.broadcast %cst_11 : f32 to vector<8x64xf32>
    %16 = arith.maximumf %14, %15 : vector<8x64xf32>
    %17 = arith.truncf %16 : vector<8x64xf32> to vector<8x64xbf16>
    %c0_12 = arith.constant 0 : index
    %c0_13 = arith.constant 0 : index
    %18 = vector.load %arg7[%c0_12, %c0_13] : memref<64x128xbf16, #tpu.memory_space<vmem>>, vector<64x128xbf16>
    %cst_14 = arith.constant dense<0.000000e+00> : vector<8x128xf32>
    %19 = tpu.matmul %17, %18, %cst_14 {dimension_numbers = #tpu.dot_dimension_numbers<[1], [0], [0], [1], [0, 0, 1, 1], [], []>} : vector<8x64xbf16>, vector<64x128xbf16>, vector<8x128xf32> -> vector<8x128xf32>
    %c0_15 = arith.constant 0 : index
    %c0_16 = arith.constant 0 : index
    %20 = vector.load %arg8[%c0_15, %c0_16] : memref<1x128xf32, #tpu.memory_space<vmem>>, vector<1x128xf32>
    %21 = vector.broadcast %20 : vector<1x128xf32> to vector<8x128xf32>
    %22 = arith.addf %19, %21 : vector<8x128xf32>
    %c0_17 = arith.constant 0 : index
    %c0_18 = arith.constant 0 : index
    %23 = vector.load %arg2[%c0_17, %c0_18] : memref<8x128xf32, #tpu.memory_space<vmem>>, vector<8x128xf32>
    %24 = arith.addf %22, %23 : vector<8x128xf32>
    %25 = tpu.iota {dimensions = array<i32: 1>} : vector<8x128xi32>
    %c8_i32 = arith.constant 8 : i32
    %26 = vector.broadcast %c8_i32 : i32 to vector<8x128xi32>
    %27 = arith.cmpi slt, %25, %26 : vector<8x128xi32>
    %cst_19 = arith.constant 0xFF800000 : f32
    %28 = vector.broadcast %cst_19 : f32 to vector<8x128xf32>
    %29 = arith.select %27, %24, %28 : vector<8x128xi1>, vector<8x128xf32>
    %cst_20 = arith.constant dense<0xFF800000> : vector<8xf32>
    %30 = vector.multi_reduction <maximumf>, %29, %cst_20 [1] : vector<8x128xf32> to vector<8xf32>
    %31 = vector.shape_cast %30 : vector<8xf32> to vector<8x1xf32>
    %32 = vector.broadcast %31 : vector<8x1xf32> to vector<8x128xf32>
    %33 = arith.cmpf oeq, %29, %32 : vector<8x128xf32>
    %c128_i32 = arith.constant 128 : i32
    %34 = vector.broadcast %c128_i32 : i32 to vector<8x128xi32>
    %35 = arith.select %33, %25, %34 : vector<8x128xi1>, vector<8x128xi32>
    %cst_21 = arith.constant dense<2147483647> : vector<8xi32>
    %36 = vector.multi_reduction <minsi>, %35, %cst_21 [1] : vector<8x128xi32> to vector<8xi32>
    %37 = vector.shape_cast %36 : vector<8xi32> to vector<8x1xi32>
    %38 = vector.broadcast %37 : vector<8x1xi32> to vector<8x128xi32>
    %39 = arith.cmpi eq, %25, %38 : vector<8x128xi32>
    %40 = arith.extui %39 : vector<8x128xi1> to vector<8x128xi32>
    %41 = arith.sitofp %40 : vector<8x128xi32> to vector<8x128xf32>
    %c0_22 = arith.constant 0 : index
    %c0_23 = arith.constant 0 : index
    %42 = vector.load %arg9[%c0_22, %c0_23] : memref<8x128xf32, #tpu.memory_space<vmem>>, vector<8x128xf32>
    tpu.vector_store %arg9[%c0_22, %c0_23], %41 {strides = array<i32>} : memref<8x128xf32, #tpu.memory_space<vmem>>, vector<8x128xf32>,
    return
  }
  func.func @transform_0(%arg0: i32) -> (i32, i32) {
    %c0_i32 = arith.constant 0 : i32
    %c0_i32_0 = arith.constant 0 : i32
    return %arg0, %c0_i32 : i32, i32
  }
  func.func @transform_1(%arg0: i32) -> (i32, i32) {
    %c0_i32 = arith.constant 0 : i32
    %c0_i32_0 = arith.constant 0 : i32
    return %arg0, %c0_i32 : i32, i32
  }
  func.func @transform_2(%arg0: i32) -> (i32, i32) {
    %c0_i32 = arith.constant 0 : i32
    %c0_i32_0 = arith.constant 0 : i32
    %c0_i32_1 = arith.constant 0 : i32
    return %c0_i32, %c0_i32_0 : i32, i32
  }
  func.func @transform_3(%arg0: i32) -> (i32, i32) {
    %c0_i32 = arith.constant 0 : i32
    %c0_i32_0 = arith.constant 0 : i32
    %c0_i32_1 = arith.constant 0 : i32
    return %c0_i32, %c0_i32_0 : i32, i32
  }
  func.func @transform_4(%arg0: i32) -> (i32, i32) {
    %c0_i32 = arith.constant 0 : i32
    %c0_i32_0 = arith.constant 0 : i32
    %c0_i32_1 = arith.constant 0 : i32
    return %c0_i32, %c0_i32_0 : i32, i32
  }
  func.func @transform_5(%arg0: i32) -> (i32, i32) {
    %c0_i32 = arith.constant 0 : i32
    %c0_i32_0 = arith.constant 0 : i32
    %c0_i32_1 = arith.constant 0 : i32
    return %c0_i32, %c0_i32_0 : i32, i32
  }
  func.func @transform_6(%arg0: i32) -> (i32, i32) {
    %c0_i32 = arith.constant 0 : i32
    %c0_i32_0 = arith.constant 0 : i32
    %c0_i32_1 = arith.constant 0 : i32
    return %c0_i32, %c0_i32_0 : i32, i32
  }
  func.func @transform_7(%arg0: i32) -> (i32, i32) {
    %c0_i32 = arith.constant 0 : i32
    %c0_i32_0 = arith.constant 0 : i32
    %c0_i32_1 = arith.constant 0 : i32
    return %c0_i32, %c0_i32_0 : i32, i32
  }
  func.func @transform_8(%arg0: i32) -> (i32, i32) {
    %c0_i32 = arith.constant 0 : i32
    %c0_i32_0 = arith.constant 0 : i32
    return %arg0, %c0_i32 : i32, i32
  }
}

</mosaic_0001>

<llo_original>
// kernel: _forward_impl.1
$region0: #{_forward_impl.1}
  #allocation0 [shape = 'u32[]', space=smem, size = 0x4, offset = 0x4, fixed_abs, tag = 'smem constant byte address 0x4 - core index']
  #allocation1 [shape = 'u32[144,128]{1,0:T(1,128)}', space=vmem, size = 0x12000, scoped, tag = 'internal scratch']
  %s0 = inlined_call_operand.vmem [shape: f32[8,16], index: 0, kind: input, shape index: {}]
  %s1 = inlined_call_operand.vmem [shape: f32[8,128], index: 1, kind: input, shape index: {}]
  %s2 = inlined_call_operand.vmem [shape: bf16[16,64], index: 2, kind: input, shape index: {}]
  %s3 = inlined_call_operand.vmem [shape: f32[1,64], index: 3, kind: input, shape index: {}]
  %s4 = inlined_call_operand.vmem [shape: bf16[64,64], index: 4, kind: input, shape index: {}]
  %s5 = inlined_call_operand.vmem [shape: f32[1,64], index: 5, kind: input, shape index: {}]
  %s6 = inlined_call_operand.vmem [shape: bf16[64,128], index: 6, kind: input, shape index: {}]
  %s7 = inlined_call_operand.vmem [shape: f32[1,128], index: 7, kind: input, shape index: {}]
  %s8 = inlined_call_operand.vmem [shape: f32[8,128], index: 8, kind: output, shape index: {}]
  %s9 = sld [smem:[#allocation0]]
  $region42: #{_forward_impl.1} parent=0
    _
  %s11 = ssub.s32 1, %s9
  %s12 = scalar_select 0, %s11, %s9
  // Predicated region
  $region2: #{_forward_impl.1} parent=0 // pred_check
    _
  $region3: #{_forward_impl.1} parent=0 // pred_check_branch
    %14 = sbr.rel (0) target = $region5
  $region4: #{_forward_impl.1} parent=0 // pred_region
    _
  $region5: #{_forward_impl.1} parent=0 // pred_fallthru
    _
  // Predicated region
  $region6: #{_forward_impl.1} parent=0 // pred_check
    _
  $region7: #{_forward_impl.1} parent=0 // pred_check_branch
    %16 = sbr.rel (0) target = $region9
  $region8: #{_forward_impl.1} parent=0 // pred_region
    _
  $region9: #{_forward_impl.1} parent=0 // pred_fallthru
    _
  // Predicated region
  $region10: #{_forward_impl.1} parent=0 // pred_check
    _
  $region11: #{_forward_impl.1} parent=0 // pred_check_branch
    %18 = sbr.rel (0) target = $region13
  $region12: #{_forward_impl.1} parent=0 // pred_region
    _
  $region13: #{_forward_impl.1} parent=0 // pred_fallthru
    _
  // Predicated region
  $region14: #{_forward_impl.1} parent=0 // pred_check
    _
  $region15: #{_forward_impl.1} parent=0 // pred_check_branch
    %20 = sbr.rel (0) target = $region17
  $region16: #{_forward_impl.1} parent=0 // pred_region
    _
  $region17: #{_forward_impl.1} parent=0 // pred_fallthru
    _
  // Predicated region
  $region18: #{_forward_impl.1} parent=0 // pred_check
    _
  $region19: #{_forward_impl.1} parent=0 // pred_check_branch
    %22 = sbr.rel (0) target = $region21
  $region20: #{_forward_impl.1} parent=0 // pred_region
    _
  $region21: #{_forward_impl.1} parent=0 // pred_fallthru
    _
  // Predicated region
  $region22: #{_forward_impl.1} parent=0 // pred_check
    _
  $region23: #{_forward_impl.1} parent=0 // pred_check_branch
    %24 = sbr.rel (0) target = $region25
  $region24: #{_forward_impl.1} parent=0 // pred_region
    _
  $region25: #{_forward_impl.1} parent=0 // pred_fallthru
    _
  // Predicated region
  $region26: #{_forward_impl.1} parent=0 // pred_check
    _
  $region27: #{_forward_impl.1} parent=0 // pred_check_branch
    %26 = sbr.rel (0) target = $region29
  $region28: #{_forward_impl.1} parent=0 // pred_region
    _
  $region29: #{_forward_impl.1} parent=0 // pred_fallthru
    _
  // Predicated region
  $region30: #{_forward_impl.1} parent=0 // pred_check
    _
  $region31: #{_forward_impl.1} parent=0 // pred_check_branch
    %28 = sbr.rel (0) target = $region33
  $region32: #{_forward_impl.1} parent=0 // pred_region
    _
  $region33: #{_forward_impl.1} parent=0 // pred_fallthru
    _
  %v30 = vld [vmem:[%s0] sm:$0xff]
  %v31 = vpack.c.bf16 %v30, %v30
  %v32 = vld [vmem:[%s2] sm:$0xf]
  %v33 = vld [vmem:[%s2 + $0x4] sm:$0xf]
  %v34 = vld [vmem:[%s3] sm:$0x1]
  %v36 = vlaneseq
  %v37 = vshrl.u32 %v36, 7
  %v38 = vsub.s32 0, %v37
  %v39 = vrot.slane %v34, %v38
  %v43 = vunpack.c.l.b16 %v32
  %v44 = vunpack.c.l.b16 %v33
  %v45 = vpack.c.b16 %v44, %v43
  %vm47 = vcmask 130048
  %v49 = vsel %vm47, %v31, 0
  %51 = vmatprep.subr.bf16.mxu0 0
  %52 = vmatpush1.bf16.msra.mxu0 %v45
  %53 = vmatprep.subr.bf16.mxu0 0
  %54 = vmatpush1.bf16.msra.mxu0 0
  %55 = vmatprep.subr.bf16.mxu0 0
  %56 = vmatpush1.bf16.msra.mxu0 0
  %57 = vmatprep.subr.bf16.mxu0 0
  %58 = vmatpush1.bf16.msra.mxu0 0
  %59 = vmatprep.subr.bf16.mxu0 0
  %60 = vmatpush1.bf16.msra.mxu0 0
  %61 = vmatprep.subr.bf16.mxu0 0
  %62 = vmatpush1.bf16.msra.mxu0 0
  %63 = vmatprep.subr.bf16.mxu0 0
  %64 = vmatpush1.bf16.msra.mxu0 0
  %65 = vmatprep.subr.bf16.mxu0 0
  %66 = vmatpush1.bf16.msra.mxu0 0
  %67 = vmatprep.subr.bf16.mxu0 0
  %68 = vmatpush1.bf16.msra.mxu0 0
  %69 = vmatprep.subr.bf16.mxu0 0
  %70 = vmatpush1.bf16.msra.mxu0 0
  %71 = vmatprep.subr.bf16.mxu0 0
  %72 = vmatpush1.bf16.msra.mxu0 0
  %73 = vmatprep.subr.bf16.mxu0 0
  %74 = vmatpush1.bf16.msra.mxu0 0
  %75 = vmatprep.subr.bf16.mxu0 0
  %76 = vmatpush1.bf16.msra.mxu0 0
  %77 = vmatprep.subr.bf16.mxu0 0
  %78 = vmatpush1.bf16.msra.mxu0 0
  %79 = vmatprep.subr.bf16.mxu0 0
  %80 = vmatpush1.bf16.msra.mxu0 0
  %81 = vmatprep.subr.bf16.mxu0 0
  %82 = vmatpush1.bf16.msra.mxu0 0
  %83 = vmatprep.mubr.bf16.mxu0 0
  %84 = vmatmul.mubr.bf16.gmra.mrb[0].mxu0 %v49
  %v85 = vpop.f32.mrb[0].mxu0
  %v86 = vadd.f32 %v39, %v85
  %v87 = vpop.f32.mrb[0].mxu0
  %v88 = vpop.f32.mrb[0].mxu0
  %v89 = vpop.f32.mrb[0].mxu0
  %90 = vdwg.mxu0
  %v91 = vmax.f32 %v86, 0.0
  %v92 = vpack.c.bf16 %v91, %v91
  %v93 = vld [vmem:[%s4] sm:$0xf]
  %v94 = vld [vmem:[%s4 + $0x4] sm:$0xf]
  %v95 = vld [vmem:[%s4 + $0x8] sm:$0xf]
  %v96 = vld [vmem:[%s4 + $0xc] sm:$0xf]
  %v97 = vld [vmem:[%s4 + $0x10] sm:$0xf]
  %v98 = vld [vmem:[%s4 + $0x14] sm:$0xf]
  %v99 = vld [vmem:[%s4 + $0x18] sm:$0xf]
  %v100 = vld [vmem:[%s4 + $0x1c] sm:$0xf]
  %v101 = vld [vmem:[%s5] sm:$0x1]
  %v103 = vlaneseq
  %v104 = vshrl.u32 %v103, 7
  %v105 = vsub.s32 0, %v104
  %v106 = vrot.slane %v101, %v105
  %v116 = vunpack.c.l.b16 %v93
  %v117 = vunpack.c.l.b16 %v94
  %v118 = vunpack.c.l.b16 %v95
  %v119 = vunpack.c.l.b16 %v96
  %v120 = vunpack.c.l.b16 %v97
  %v121 = vunpack.c.l.b16 %v98
  %v122 = vunpack.c.l.b16 %v99
  %v123 = vunpack.c.l.b16 %v100
  %v124 = vpack.c.b16 %v117, %v116
  %v125 = vpack.c.b16 %v119, %v118
  %v126 = vpack.c.b16 %v121, %v120
  %v127 = vpack.c.b16 %v123, %v122
  %vm132 = vcmask 523264
  %v134 = vsel %vm132, %v92, 0
  %136 = vmatprep.subr.bf16.mxu0 0
  %137 = vmatpush1.bf16.msra.mxu0 %v124
  %138 = vmatprep.subr.bf16.mxu0 0
  %139 = vmatpush1.bf16.msra.mxu0 %v125
  %140 = vmatprep.subr.bf16.mxu0 0
  %141 = vmatpush1.bf16.msra.mxu0 %v126
  %142 = vmatprep.subr.bf16.mxu0 0
  %143 = vmatpush1.bf16.msra.mxu0 %v127
  %144 = vmatprep.subr.bf16.mxu0 0
  %145 = vmatpush1.bf16.msra.mxu0 0
  %146 = vmatprep.subr.bf16.mxu0 0
  %147 = vmatpush1.bf16.msra.mxu0 0
  %148 = vmatprep.subr.bf16.mxu0 0
  %149 = vmatpush1.bf16.msra.mxu0 0
  %150 = vmatprep.subr.bf16.mxu0 0
  %151 = vmatpush1.bf16.msra.mxu0 0
  %152 = vmatprep.subr.bf16.mxu0 0
  %153 = vmatpush1.bf16.msra.mxu0 0
  %154 = vmatprep.subr.bf16.mxu0 0
  %155 = vmatpush1.bf16.msra.mxu0 0
  %156 = vmatprep.subr.bf16.mxu0 0
  %157 = vmatpush1.bf16.msra.mxu0 0
  %158 = vmatprep.subr.bf16.mxu0 0
  %159 = vmatpush1.bf16.msra.mxu0 0
  %160 = vmatprep.subr.bf16.mxu0 0
  %161 = vmatpush1.bf16.msra.mxu0 0
  %162 = vmatprep.subr.bf16.mxu0 0
  %163 = vmatpush1.bf16.msra.mxu0 0
  %164 = vmatprep.subr.bf16.mxu0 0
  %165 = vmatpush1.bf16.msra.mxu0 0
  %166 = vmatprep.subr.bf16.mxu0 0
  %167 = vmatpush1.bf16.msra.mxu0 0
  %168 = vmatprep.mubr.bf16.mxu0 0
  %169 = vmatmul.mubr.bf16.gmra.mrb[0].mxu0 %v134
  %v170 = vpop.f32.mrb[0].mxu0
  %v171 = vadd.f32 %v106, %v170
  %v172 = vpop.f32.mrb[0].mxu0
  %v173 = vpop.f32.mrb[0].mxu0
  %v174 = vpop.f32.mrb[0].mxu0
  %175 = vdwg.mxu0
  %v176 = vmax.f32 %v171, 0.0
  %v177 = vpack.c.bf16 %v176, %v176
  %v178 = vld [vmem:[%s6] sm:$0xf]
  %v179 = vld [vmem:[%s6 + $0x4] sm:$0xf]
  %v180 = vld [vmem:[%s6 + $0x8] sm:$0xf]
  %v181 = vld [vmem:[%s6 + $0xc] sm:$0xf]
  %v182 = vld [vmem:[%s6 + $0x10] sm:$0xf]
  %v183 = vld [vmem:[%s6 + $0x14] sm:$0xf]
  %v184 = vld [vmem:[%s6 + $0x18] sm:$0xf]
  %v185 = vld [vmem:[%s6 + $0x1c] sm:$0xf]
  %v186 = vld [vmem:[%s7] sm:$0x1]
  %v188 = vlaneseq
  %v189 = vshrl.u32 %v188, 7
  %v190 = vsub.s32 0, %v189
  %v191 = vrot.slane %v186, %v190
  %v201 = vunpack.c.l.b16 %v178
  %v202 = vunpack.c.l.b16 %v179
  %v203 = vunpack.c.l.b16 %v180
  %v204 = vunpack.c.l.b16 %v181
  %v205 = vunpack.c.l.b16 %v182
  %v206 = vunpack.c.l.b16 %v183
  %v207 = vunpack.c.l.b16 %v184
  %v208 = vunpack.c.l.b16 %v185
  %v209 = vpack.c.b16 %v202, %v201
  %v210 = vpack.c.b16 %v204, %v203
  %v211 = vpack.c.b16 %v206, %v205
  %v212 = vpack.c.b16 %v208, %v207
  %v218 = vsel %vm132, %v177, 0
  %220 = vmatprep.subr.bf16.mxu0 0
  %221 = vmatpush1.bf16.msra.mxu0 %v209
  %222 = vmatprep.subr.bf16.mxu0 0
  %223 = vmatpush1.bf16.msra.mxu0 %v210
  %224 = vmatprep.subr.bf16.mxu0 0
  %225 = vmatpush1.bf16.msra.mxu0 %v211
  %226 = vmatprep.subr.bf16.mxu0 0
  %227 = vmatpush1.bf16.msra.mxu0 %v212
  %228 = vmatprep.subr.bf16.mxu0 0
  %229 = vmatpush1.bf16.msra.mxu0 0
  %230 = vmatprep.subr.bf16.mxu0 0
  %231 = vmatpush1.bf16.msra.mxu0 0
  %232 = vmatprep.subr.bf16.mxu0 0
  %233 = vmatpush1.bf16.msra.mxu0 0
  %234 = vmatprep.subr.bf16.mxu0 0
  %235 = vmatpush1.bf16.msra.mxu0 0
  %236 = vmatprep.subr.bf16.mxu0 0
  %237 = vmatpush1.bf16.msra.mxu0 0
  %238 = vmatprep.subr.bf16.mxu0 0
  %239 = vmatpush1.bf16.msra.mxu0 0
  %240 = vmatprep.subr.bf16.mxu0 0
  %241 = vmatpush1.bf16.msra.mxu0 0
  %242 = vmatprep.subr.bf16.mxu0 0
  %243 = vmatpush1.bf16.msra.mxu0 0
  %244 = vmatprep.subr.bf16.mxu0 0
  %245 = vmatpush1.bf16.msra.mxu0 0
  %246 = vmatprep.subr.bf16.mxu0 0
  %247 = vmatpush1.bf16.msra.mxu0 0
  %248 = vmatprep.subr.bf16.mxu0 0
  %249 = vmatpush1.bf16.msra.mxu0 0
  %250 = vmatprep.subr.bf16.mxu0 0
  %251 = vmatpush1.bf16.msra.mxu0 0
  %252 = vmatprep.mubr.bf16.mxu0 0
  %253 = vmatmul.mubr.bf16.gmra.mrb[0].mxu0 %v218
  %v254 = vpop.f32.mrb[0].mxu0
  %v255 = vadd.f32 %v191, %v254
  %v256 = vpop.f32.mrb[0].mxu0
  %v257 = vpop.f32.mrb[0].mxu0
  %v258 = vpop.f32.mrb[0].mxu0
  %259 = vdwg.mxu0
  %v260 = vld [vmem:[%s1] sm:$0xff]
  %v261 = vadd.f32 %v255, %v260
  %v262 = vlaneseq
  %v263 = vand.u32 %v262, 127
  %vm264 = vcmp.lt.s32.totalorder %v263, 8
  %v265 = vsel %vm264, %v261, -inf
  %266 = vmax.xlane.f32.xlu0 %v265
  %v267 = vpop.xlane.xlu0 %266
  %vm268 = vcmp.eq.f32.partialorder %v265, %v267
  %v269 = vsel %vm268, %v263, 128
  %v270 = vand.u32 %v269, 65535
  %v271 = vshra.s32 %v269, 16
  %v272 = vcvt.s32.f32 %v270
  %v273 = vcvt.s32.f32 %v271
  %274 = vmin.xlane.f32.xlu0 %v273
  %v275 = vpop.xlane.xlu0 %274
  %vm276 = vcmp.eq.f32.partialorder %v273, %v275
  %v277 = vsel %vm276, %v272, inf
  %278 = vmin.xlane.f32.xlu0 %v277
  %v279 = vpop.xlane.xlu0 %278
  %v280 = vcvt.f32.s32 %v279
  %v281 = vcvt.f32.s32 %v275
  %v282 = vshll.u32 %v281, 16
  %v283 = vadd.s32 %v282, %v280
  %vm284 = vcmp.eq.s32.totalorder %v263, %v283
  %v285 = vsel %vm284, 1, 0
  %v286 = vcvt.s32.f32 %v285
  %287 = vst [vmem:[%s8] sm:$0xff] %v286
  // Predicated region
  $region34: #{_forward_impl.1} parent=0 // pred_check
    _
  $region35: #{_forward_impl.1} parent=0 // pred_check_branch
    %289 = sbr.rel (0) target = $region37
  $region36: #{_forward_impl.1} parent=0 // pred_region
    _
  $region37: #{_forward_impl.1} parent=0 // pred_fallthru
    _
  // Predicated region
  $region38: #{_forward_impl.1} parent=0 // pred_check
    _
  $region39: #{_forward_impl.1} parent=0 // pred_check_branch
    %291 = sbr.rel (0) target = $region41
  $region40: #{_forward_impl.1} parent=0 // pred_region
    _
  $region41: #{_forward_impl.1} parent=0 // pred_fallthru
    _

</llo_original>
